<compile_context>
chip_gen: v6e
topology: v6e:2x2x1
jax: 0.10.0
libtpu: 0.0.40
codegen_flags: <defaults>
</compile_context>

<pallas_src>
import functools

import jax
import jax.numpy as jnp
from jax import lax
from jax.experimental import pallas as pl
from jax.experimental.pallas import tpu as pltpu


def dpn_loss_kernel(u_ref, y_ref, tv_ref, wt_ref, b_ref, o_ref,
                    *, m, loss_rate, apply_t, assume_one_hot):
    u = u_ref[...]          # [B, bit]  f32
    y = y_ref[...]          # [B, C]    f32
    tv = tv_ref[...]        # [C, bit]  f32 (+/-1)
    wt = wt_ref[...]        # [bit, C]  f32 (cla weight, transposed)
    bias = b_ref[...]       # [1, C]    f32

    B, C = y.shape

    # Optional '-T' thresholding:  u = (|u| > m) * sign(u)
    # (reference applies it before BOTH the polarization term and the
    #  classifier; torch.sign(0) == 0 matches jnp.sign).
    if apply_t:
        u = (jnp.abs(u) > m).astype(jnp.float32) * jnp.sign(u)

    iota_c = lax.broadcasted_iota(jnp.int32, (B, C), 1)

    # ---- label2center (single-label): t = target_vectors[argmax(y, 1)] ----
    if assume_one_hot:
        # y is one-hot  =>  the gather IS y @ tv.  bf16 operands are exact
        # here ({0,1} x {+/-1}, tiny exact accumulation) and halve MXU passes.
        t = jnp.dot(y.astype(jnp.bfloat16), tv.astype(jnp.bfloat16),
                    preferred_element_type=jnp.float32)                # [B, bit]
    else:
        # First-max argmax + gather-as-matmul fallback for non-one-hot labels.
        row_max = jnp.max(y, axis=1, keepdims=True)
        idx = jnp.min(jnp.where(y == row_max, iota_c, C), axis=1, keepdims=True)
        sel = (iota_c == idx).astype(jnp.float32)
        t = jnp.dot(sel, tv, preferred_element_type=jnp.float32)       # [B, bit]

    # ---- polarization loss: mean(clamp(m - u*t, min=0)) ----
    pol = jnp.mean(jnp.maximum(m - u * t, 0.0))

    # ---- classifier: logits = u @ W^T + b ----
    # (keep f32 here for numerical fidelity; cast to bf16 when scaling B/bit/C)
    logits = jnp.dot(u, wt, preferred_element_type=jnp.float32) + bias  # [B, C]

    # ---- log_softmax over classes ----
    shifted = logits - jnp.max(logits, axis=1, keepdims=True)
    logp = shifted - jnp.log(jnp.sum(jnp.exp(shifted), axis=1, keepdims=True))

    # ---- LO loss (normalized CE), faithful to the reference:
    # labels = y.max(dim=1)[0]  (max VALUES, not indices) cast to int, one-hot.
    labels = jnp.max(y, axis=1, keepdims=True).astype(jnp.int32)        # [B, 1]
    lab_oh = (iota_c == labels).astype(jnp.float32)                     # [B, C]
    num = -jnp.sum(lab_oh * logp, axis=1, keepdims=True)                # [B, 1]
    den = -jnp.sum(logp, axis=1, keepdims=True)                         # [B, 1]
    nce = num * pl.reciprocal(den, approx=True)                         # EUP slot
    lo = jnp.mean(nce)

    # Scalar loss -> SMEM output (no padded (8,128) VMEM tile writeback).
    o_ref[0, 0] = pol + loss_rate * lo


def dpn_loss_forward(u, y, U, Y, ind, target_vectors, cla_w_t, cla_b,
                     *, m, loss_rate, apply_t=False, assume_one_hot=True):
    """Returns (loss_scalar, U_updated, Y_updated).

    `cla_w_t` is the classifier weight already transposed to [bit, n_class],
    hoisted out of the per-step path so no transpose op is paid per call.
    """
    y = y.astype(jnp.float32)
    # Persistent-buffer side effects of the PyTorch forward (glue, not hot path):
    U = U.at[ind].set(u)
    Y = Y.at[ind].set(y)

    B, bit = u.shape
    C = y.shape[1]
    bias = cla_b.reshape(1, C)

    kernel = functools.partial(
        dpn_loss_kernel, m=float(m), loss_rate=float(loss_rate),
        apply_t=bool(apply_t), assume_one_hot=bool(assume_one_hot))

    cost = pl.CostEstimate(
        flops=int(4 * B * bit * C + 12 * B * C + 4 * B * bit),
        transcendentals=int(B * C + 2 * B),
        bytes_accessed=int(4 * (u.size + y.size + target_vectors.size
                                + cla_w_t.size + bias.size) + 4),
    )

    out = pl.pallas_call(
        kernel,
        out_shape=jax.ShapeDtypeStruct((1, 1), jnp.float32),
        grid=(1,),
        in_specs=[
            pl.BlockSpec((B, bit), lambda i: (0, 0)),
            pl.BlockSpec((B, C), lambda i: (0, 0)),
            pl.BlockSpec((C, bit), lambda i: (0, 0)),
            pl.BlockSpec((bit, C), lambda i: (0, 0)),
            pl.BlockSpec((1, C), lambda i: (0, 0)),
        ],
        out_specs=pl.BlockSpec(memory_space=pltpu.MemorySpace.SMEM),
        compiler_params=pltpu.CompilerParams(
            dimension_semantics=("arbitrary",)),
        cost_estimate=cost,
    )(u, y, target_vectors, cla_w_t, bias)

    # TODO(synk): when B scales to >=256, tile the batch (grid=(B//TB,),
    # dimension_semantics=("parallel",), per-tile pol/nce partial sums combined
    # in JAX) to use v7x's 2nd TensorCore, and re-derive the [B,C] block
    # footprint / vmem_limit_bytes against v7x's 64 MiB VMEM.
    return out[0, 0], U, Y


if __name__ == "__main__":
    # Synthetic, deterministic setup (mirrors DPNLoss.__init__ shapes).
    key = jax.random.PRNGKey(0)
    k_tv, k_w, k_b, k_u, k_lab = jax.random.split(key, 5)

    B = 8            # batch
    bit = 32         # hash code length
    n_class = 16     # number of classes
    num_train = 64   # training-set size (for U / Y buffers)
    m = 0.5
    loss_rate = 0.1
    p = 0.5

    # get_target_vectors: +/-1 vectors with ~p fraction of -1 per class.
    target_vectors = jnp.where(
        jax.random.uniform(k_tv, (n_class, bit)) < p, -1.0, 1.0
    ).astype(jnp.float32)

    # nn.Linear(bit, n_class) parameters, deterministic init.
    bound = 1.0 / (bit ** 0.5)
    cla_w = jax.random.uniform(k_w, (n_class, bit), minval=-bound, maxval=bound,
                               dtype=jnp.float32)
    cla_b = jax.random.uniform(k_b, (n_class,), minval=-bound, maxval=bound,
                               dtype=jnp.float32)
    # Hoisted once, outside the per-step path (perf review item).
    cla_w_t = cla_w.T                      # [bit, n_class]

    # Persistent buffers U, Y.
    U = jnp.zeros((num_train, bit), jnp.float32)
    Y = jnp.zeros((num_train, n_class), jnp.float32)

    # Batch inputs: continuous codes u, one-hot labels y, dataset indices ind.
    u = jax.random.normal(k_u, (B, bit), dtype=jnp.float32)
    label_idx = jax.random.randint(k_lab, (B,), 0, n_class)
    y = jax.nn.one_hot(label_idx, n_class, dtype=jnp.float32)
    ind = jnp.arange(B, dtype=jnp.int32)

    # TODO(synk): multi-label label2center branch (random-center substitution)
    # is not exercised here; single-label dataset path is implemented.
    loss, U_new, Y_new = dpn_loss_forward(
        u, y, U, Y, ind, target_vectors, cla_w_t, cla_b,
        m=m, loss_rate=loss_rate, apply_t=False, assume_one_hot=True)

    loss = jax.block_until_ready(loss)
    jax.block_until_ready((U_new, Y_new))
    assert jnp.isfinite(loss), f"non-finite loss: {loss}"
    print("KERNEL_OK")
</pallas_src>

<mosaic_0001>
module attributes {stable_mosaic.version = 11 : i64} {
  func.func @dpn_loss_kernel(%arg0: i32, %arg1: memref<8x32xf32, #tpu.memory_space<vmem>>, %arg2: memref<8x16xf32, #tpu.memory_space<vmem>>, %arg3: memref<16x32xf32, #tpu.memory_space<vmem>>, %arg4: memref<32x16xf32, #tpu.memory_space<vmem>>, %arg5: memref<1x16xf32, #tpu.memory_space<vmem>>, %arg6: memref<1x1xf32, #tpu.memory_space<smem>>) attributes {dimension_semantics = [#tpu.dimension_semantics<arbitrary>], iteration_bounds = array<i64: 1>, scalar_prefetch = 0 : i64, scratch_operands = 0 : i64, tpu.core_type = #tpu.core_type<tc>, window_params = [{pipeline_mode = #tpu.pipeline_mode<synchronous>, transform_indices = @transform_0, window_bounds = array<i64: 8, 32>}, {pipeline_mode = #tpu.pipeline_mode<synchronous>, transform_indices = @transform_1, window_bounds = array<i64: 8, 16>}, {pipeline_mode = #tpu.pipeline_mode<synchronous>, transform_indices = @transform_2, window_bounds = array<i64: 16, 32>}, {pipeline_mode = #tpu.pipeline_mode<synchronous>, transform_indices = @transform_3, window_bounds = array<i64: 32, 16>}, {pipeline_mode = #tpu.pipeline_mode<synchronous>, transform_indices = @transform_4, window_bounds = array<i64: 1, 16>}, {transform_indices = @transform_5, window_bounds = array<i64: 1, 1>}]} {
    %c0 = arith.constant 0 : index
    %c0_0 = arith.constant 0 : index
    %0 = vector.load %arg1[%c0, %c0_0] : memref<8x32xf32, #tpu.memory_space<vmem>>, vector<8x32xf32>
    %c0_1 = arith.constant 0 : index
    %c0_2 = arith.constant 0 : index
    %1 = vector.load %arg2[%c0_1, %c0_2] : memref<8x16xf32, #tpu.memory_space<vmem>>, vector<8x16xf32>
    %c0_3 = arith.constant 0 : index
    %c0_4 = arith.constant 0 : index
    %2 = vector.load %arg3[%c0_3, %c0_4] : memref<16x32xf32, #tpu.memory_space<vmem>>, vector<16x32xf32>
    %c0_5 = arith.constant 0 : index
    %c0_6 = arith.constant 0 : index
    %3 = vector.load %arg4[%c0_5, %c0_6] : memref<32x16xf32, #tpu.memory_space<vmem>>, vector<32x16xf32>
    %c0_7 = arith.constant 0 : index
    %c0_8 = arith.constant 0 : index
    %4 = vector.load %arg5[%c0_7, %c0_8] : memref<1x16xf32, #tpu.memory_space<vmem>>, vector<1x16xf32>
    %5 = tpu.iota {dimensions = array<i32: 1>} : vector<8x16xi32>
    %6 = arith.truncf %1 : vector<8x16xf32> to vector<8x16xbf16>
    %7 = arith.truncf %2 : vector<16x32xf32> to vector<16x32xbf16>
    %cst = arith.constant dense<0.000000e+00> : vector<8x32xf32>
    %8 = tpu.matmul %6, %7, %cst {dimension_numbers = #tpu.dot_dimension_numbers<[1], [0], [0], [1], [0, 0, 1, 1], [], []>} : vector<8x16xbf16>, vector<16x32xbf16>, vector<8x32xf32> -> vector<8x32xf32>
    %9 = arith.mulf %0, %8 : vector<8x32xf32>
    %cst_9 = arith.constant 5.000000e-01 : f32
    %10 = vector.broadcast %cst_9 : f32 to vector<8x32xf32>
    %11 = arith.subf %10, %9 : vector<8x32xf32>
    %cst_10 = arith.constant 0.000000e+00 : f32
    %12 = vector.broadcast %cst_10 : f32 to vector<8x32xf32>
    %13 = arith.maximumf %11, %12 : vector<8x32xf32>
    %14 = vector.shape_cast %13 : vector<8x32xf32> to vector<1x8x32xf32>
    %cst_11 = arith.constant dense<0.000000e+00> : vector<1xf32>
    %15 = vector.multi_reduction <add>, %14, %cst_11 [1, 2] : vector<1x8x32xf32> to vector<1xf32>
    %16 = vector.shape_cast %15 : vector<1xf32> to vector<1x1x1xf32>
    %17 = vector.extract %16[0, 0, 0] : f32 from vector<1x1x1xf32>
    %cst_12 = arith.constant 2.560000e+02 : f32
    %18 = arith.divf %17, %cst_12 : f32
    %cst_13 = arith.constant dense<0.000000e+00> : vector<8x16xf32>
    %19 = tpu.matmul %0, %3, %cst_13 {dimension_numbers = #tpu.dot_dimension_numbers<[1], [0], [0], [1], [0, 0, 1, 1], [], []>} : vector<8x32xf32>, vector<32x16xf32>, vector<8x16xf32> -> vector<8x16xf32>
    %20 = vector.broadcast %4 : vector<1x16xf32> to vector<8x16xf32>
    %21 = arith.addf %19, %20 : vector<8x16xf32>
    %cst_14 = arith.constant dense<0xFF800000> : vector<8xf32>
    %22 = vector.multi_reduction <maximumf>, %21, %cst_14 [1] : vector<8x16xf32> to vector<8xf32>
    %23 = vector.shape_cast %22 : vector<8xf32> to vector<8x1xf32>
    %24 = vector.broadcast %23 : vector<8x1xf32> to vector<8x16xf32>
    %25 = arith.subf %21, %24 : vector<8x16xf32>
    %26 = math.exp %25 : vector<8x16xf32>
    %cst_15 = arith.constant dense<0.000000e+00> : vector<8xf32>
    %27 = vector.multi_reduction <add>, %26, %cst_15 [1] : vector<8x16xf32> to vector<8xf32>
    %28 = vector.shape_cast %27 : vector<8xf32> to vector<8x1xf32>
    %29 = math.log %28 : vector<8x1xf32>
    %30 = vector.broadcast %29 : vector<8x1xf32> to vector<8x16xf32>
    %31 = arith.subf %25, %30 : vector<8x16xf32>
    %cst_16 = arith.constant dense<0xFF800000> : vector<8xf32>
    %32 = vector.multi_reduction <maximumf>, %1, %cst_16 [1] : vector<8x16xf32> to vector<8xf32>
    %33 = vector.shape_cast %32 : vector<8xf32> to vector<8x1xf32>
    %34 = arith.fptosi %33 : vector<8x1xf32> to vector<8x1xi32>
    %35 = vector.broadcast %34 : vector<8x1xi32> to vector<8x16xi32>
    %36 = arith.cmpi eq, %5, %35 : vector<8x16xi32>
    %37 = arith.extui %36 : vector<8x16xi1> to vector<8x16xi32>
    %38 = arith.sitofp %37 : vector<8x16xi32> to vector<8x16xf32>
    %39 = arith.mulf %38, %31 : vector<8x16xf32>
    %cst_17 = arith.constant dense<0.000000e+00> : vector<8xf32>
    %40 = vector.multi_reduction <add>, %39, %cst_17 [1] : vector<8x16xf32> to vector<8xf32>
    %41 = vector.shape_cast %40 : vector<8xf32> to vector<8x1xf32>
    %cst_18 = arith.constant 0.000000e+00 : f32
    %42 = vector.broadcast %cst_18 : f32 to vector<8x1xf32>
    %43 = arith.subf %42, %41 : vector<8x1xf32>
    %cst_19 = arith.constant dense<0.000000e+00> : vector<8xf32>
    %44 = vector.multi_reduction <add>, %31, %cst_19 [1] : vector<8x16xf32> to vector<8xf32>
    %45 = vector.shape_cast %44 : vector<8xf32> to vector<8x1xf32>
    %cst_20 = arith.constant 0.000000e+00 : f32
    %46 = vector.broadcast %cst_20 : f32 to vector<8x1xf32>
    %47 = arith.subf %46, %45 : vector<8x1xf32>
    %48 = tpu.reciprocal %47 {approx = true} : vector<8x1xf32> -> vector<8x1xf32>
    %49 = arith.mulf %43, %48 : vector<8x1xf32>
    %50 = vector.shape_cast %49 : vector<8x1xf32> to vector<1x8x1xf32>
    %cst_21 = arith.constant dense<0.000000e+00> : vector<1xf32>
    %51 = vector.multi_reduction <add>, %50, %cst_21 [1, 2] : vector<1x8x1xf32> to vector<1xf32>
    %52 = vector.shape_cast %51 : vector<1xf32> to vector<1x1x1xf32>
    %53 = vector.extract %52[0, 0, 0] : f32 from vector<1x1x1xf32>
    %cst_22 = arith.constant 8.000000e+00 : f32
    %54 = arith.divf %53, %cst_22 : f32
    %cst_23 = arith.constant 1.000000e-01 : f32
    %55 = arith.mulf %cst_23, %54 : f32
    %56 = arith.addf %18, %55 : f32
    %c0_24 = arith.constant 0 : index
    %c0_25 = arith.constant 0 : index
    %57 = memref.load %arg6[%c0_24, %c0_25] : memref<1x1xf32, #tpu.memory_space<smem>>
    memref.store %56, %arg6[%c0_24, %c0_25] : memref<1x1xf32, #tpu.memory_space<smem>>
    return
  }
  func.func @transform_0(%arg0: i32) -> (i32, i32) {
    %c0_i32 = arith.constant 0 : i32
    %c0_i32_0 = arith.constant 0 : i32
    %c0_i32_1 = arith.constant 0 : i32
    return %c0_i32, %c0_i32_0 : i32, i32
  }
  func.func @transform_1(%arg0: i32) -> (i32, i32) {
    %c0_i32 = arith.constant 0 : i32
    %c0_i32_0 = arith.constant 0 : i32
    %c0_i32_1 = arith.constant 0 : i32
    return %c0_i32, %c0_i32_0 : i32, i32
  }
  func.func @transform_2(%arg0: i32) -> (i32, i32) {
    %c0_i32 = arith.constant 0 : i32
    %c0_i32_0 = arith.constant 0 : i32
    %c0_i32_1 = arith.constant 0 : i32
    return %c0_i32, %c0_i32_0 : i32, i32
  }
  func.func @transform_3(%arg0: i32) -> (i32, i32) {
    %c0_i32 = arith.constant 0 : i32
    %c0_i32_0 = arith.constant 0 : i32
    %c0_i32_1 = arith.constant 0 : i32
    return %c0_i32, %c0_i32_0 : i32, i32
  }
  func.func @transform_4(%arg0: i32) -> (i32, i32) {
    %c0_i32 = arith.constant 0 : i32
    %c0_i32_0 = arith.constant 0 : i32
    %c0_i32_1 = arith.constant 0 : i32
    return %c0_i32, %c0_i32_0 : i32, i32
  }
  func.func @transform_5(%arg0: i32) -> (i32, i32) {
    %c0_i32 = arith.constant 0 : i32
    %c0_i32_0 = arith.constant 0 : i32
    %c0_i32_1 = arith.constant 0 : i32
    return %c0_i32, %c0_i32_0 : i32, i32
  }
}

</mosaic_0001>

<llo_original>
// kernel: tpu_custom_call.1
$region0: #{tpu_custom_call.1}
  #allocation0 [shape = 'u32[]', space=smem, size = 0x4, offset = 0x4, fixed_abs, tag = 'smem constant byte address 0x4 - core index']
  #allocation1 [shape = 'u32[144,128]{1,0:T(1,128)}', space=vmem, size = 0x12000, scoped, tag = 'internal scratch']
  %s0 = inlined_call_operand.vmem [shape: f32[8,32], index: 0, kind: input, shape index: {}]
  %s1 = inlined_call_operand.vmem [shape: f32[8,16], index: 1, kind: input, shape index: {}]
  %s2 = inlined_call_operand.vmem [shape: f32[16,32], index: 2, kind: input, shape index: {}]
  %s3 = inlined_call_operand.vmem [shape: f32[32,16], index: 3, kind: input, shape index: {}]
  %s4 = inlined_call_operand.vmem [shape: f32[1,16], index: 4, kind: input, shape index: {}]
  %s5 = inlined_call_operand.hbm [shape: f32[1,1], index: 5, kind: output, shape index: {}]
  %s6 = sld [smem:[#allocation0]]
  $region30: #{tpu_custom_call.1} parent=0
    _
  %s8 = ssub.s32 1, %s6
  %s9 = scalar_select 0, %s8, %s6
  $region1: #{tpu_custom_call.1} parent=0
    #allocation2 [shape = 'u8[512]{0}', space=smem, size = 0x200, scoped, tag = 'output window, operand 0, single buffered']
    #allocation3 [shape = 's32[1]{0}', space=sflag, size = 0x4, scoped, tag = 'scoped memory for tpu_custom_call.1']
    %10 = vsyncpa [#allocation3], 0
    // Predicated region
    $region2: #{tpu_custom_call.1} parent=1 // pred_check
      _
    $region3: #{tpu_custom_call.1} parent=1 // pred_check_branch
      %12 = sbr.rel (0) target = $region5
    $region4: #{tpu_custom_call.1} parent=1 // pred_region
      _
    $region5: #{tpu_custom_call.1} parent=1 // pred_fallthru
      _
    // Predicated region
    $region6: #{tpu_custom_call.1} parent=1 // pred_check
      _
    $region7: #{tpu_custom_call.1} parent=1 // pred_check_branch
      %14 = sbr.rel (0) target = $region9
    $region8: #{tpu_custom_call.1} parent=1 // pred_region
      _
    $region9: #{tpu_custom_call.1} parent=1 // pred_fallthru
      _
    // Predicated region
    $region10: #{tpu_custom_call.1} parent=1 // pred_check
      _
    $region11: #{tpu_custom_call.1} parent=1 // pred_check_branch
      %16 = sbr.rel (0) target = $region13
    $region12: #{tpu_custom_call.1} parent=1 // pred_region
      _
    $region13: #{tpu_custom_call.1} parent=1 // pred_fallthru
      _
    // Predicated region
    $region14: #{tpu_custom_call.1} parent=1 // pred_check
      _
    $region15: #{tpu_custom_call.1} parent=1 // pred_check_branch
      %18 = sbr.rel (0) target = $region17
    $region16: #{tpu_custom_call.1} parent=1 // pred_region
      _
    $region17: #{tpu_custom_call.1} parent=1 // pred_fallthru
      _
    // Predicated region
    $region18: #{tpu_custom_call.1} parent=1 // pred_check
      _
    $region19: #{tpu_custom_call.1} parent=1 // pred_check_branch
      %20 = sbr.rel (0) target = $region21
    $region20: #{tpu_custom_call.1} parent=1 // pred_region
      _
    $region21: #{tpu_custom_call.1} parent=1 // pred_fallthru
      _
    %v22 = vld [vmem:[%s0] sm:$0xff]
    %v23 = vld [vmem:[%s1] sm:$0xff]
    %v24 = vld [vmem:[%s2] sm:$0xff]
    %v25 = vld [vmem:[%s2 + $0x8] sm:$0xff]
    %v26 = vld [vmem:[%s3] sm:$0xff]
    %v27 = vld [vmem:[%s3 + $0x8] sm:$0xff]
    %v28 = vld [vmem:[%s3 + $0x10] sm:$0xff]
    %v29 = vld [vmem:[%s3 + $0x18] sm:$0xff]
    %v30 = vld [vmem:[%s4] sm:$0x1]
    %v31 = vlaneseq
    %v32 = vand.u32 %v31, 127
    %v33 = vpack.c.bf16 %v23, %v23
    %v34 = vpack.c.bf16 %v25, %v24
    %vm35 = vcmask 130048
    %v37 = vsel %vm35, %v33, 0
    %39 = vmatprep.subr.bf16.mxu0 0
    %40 = vmatpush1.bf16.msra.mxu0 0
    %41 = vmatprep.subr.bf16.mxu0 0
    %42 = vmatpush1.bf16.msra.mxu0 0
    %43 = vmatprep.subr.bf16.mxu0 0
    %44 = vmatpush1.bf16.msra.mxu0 0
    %45 = vmatprep.subr.bf16.mxu0 0
    %46 = vmatpush1.bf16.msra.mxu0 0
    %47 = vmatprep.subr.bf16.mxu0 0
    %48 = vmatpush1.bf16.msra.mxu0 0
    %49 = vmatprep.subr.bf16.mxu0 0
    %50 = vmatpush1.bf16.msra.mxu0 0
    %51 = vmatprep.subr.bf16.mxu0 0
    %52 = vmatpush1.bf16.msra.mxu0 0
    %53 = vmatprep.subr.bf16.mxu0 0
    %54 = vmatpush1.bf16.msra.mxu0 %v34
    %55 = vmatprep.subr.bf16.mxu0 0
    %56 = vmatpush2.bf16.msra.mxu0 0
    %57 = vmatprep.subr.bf16.mxu0 0
    %58 = vmatpush2.bf16.msra.mxu0 0
    %59 = vmatprep.subr.bf16.mxu0 0
    %60 = vmatpush2.bf16.msra.mxu0 0
    %61 = vmatprep.subr.bf16.mxu0 0
    %62 = vmatpush2.bf16.msra.mxu0 0
    %63 = vmatprep.subr.bf16.mxu0 0
    %64 = vmatpush2.bf16.msra.mxu0 0
    %65 = vmatprep.subr.bf16.mxu0 0
    %66 = vmatpush2.bf16.msra.mxu0 0
    %67 = vmatprep.subr.bf16.mxu0 0
    %68 = vmatpush2.bf16.msra.mxu0 0
    %69 = vmatprep.subr.bf16.mxu0 0
    %70 = vmatpush2.bf16.msra.mxu0 0
    %71 = vmatprep.mubr.bf16.mxu0 0
    %72 = vmatmul.mubr.bf16.gmra.mxu0 %v37
    %v73 = vpop.f32.mrf.mxu0
    %v74 = vadd.f32 0.0, %v73
    %v75 = vpop.f32.mrf.mxu0
    %v76 = vpop.f32.mrf.mxu0
    %v77 = vpop.f32.mrf.mxu0
    %78 = vdwg.mxu0
    %v79 = vmul.f32 %v22, %v74
    %v80 = vsub.f32 0.5, %v79
    %v81 = vmax.f32 %v80, 0.0
    %vm82 = vcmask 261120
    %v83 = vsel %vm82, %v81, 0.0
    %84 = vadd.xlane.f32.xlu0 %v83
    %v85 = vpop.xlane.xlu0 %84
    %v86 = vrot.slane %v85, 4
    %v87 = vadd.f32 %v85, %v86
    %v88 = vrot.slane %v87, 2
    %v89 = vadd.f32 %v87, %v88
    %v90 = vrot.slane %v89, 1
    %v91 = vadd.f32 %v89, %v90
    %s92 = vtos %v91
    %v93 = vrcp.pop 256.0
    %s94 = vtos %v93
    %s95 = smul.f32 %s92, %s94
    %v97 = vlaneseq
    %v98 = vshrl.u32 %v97, 7
    %v99 = vsub.s32 0, %v98
    %v100 = vrot.slane %v30, %v99
    %v103 = vsel %vm82, %v22, 0
    %105 = vmatprep.subr.mxu0 0.0
    %106 = vmatpush1.msra.mxu0 0.0
    %107 = vmatprep.subr.mxu0 0.0
    %108 = vmatpush1.msra.mxu0 0.0
    %109 = vmatprep.subr.mxu0 0.0
    %110 = vmatpush1.msra.mxu0 0.0
    %111 = vmatprep.subr.mxu0 0.0
    %112 = vmatpush1.msra.mxu0 0.0
    %113 = vmatprep.subr.mxu0 0.0
    %114 = vmatpush1.msra.mxu0 0.0
    %115 = vmatprep.subr.mxu0 0.0
    %116 = vmatpush1.msra.mxu0 0.0
    %117 = vmatprep.subr.mxu0 0.0
    %118 = vmatpush1.msra.mxu0 0.0
    %119 = vmatprep.subr.mxu0 0.0
    %120 = vmatpush1.msra.mxu0 0.0
    %121 = vmatprep.subr.mxu0 0.0
    %122 = vmatpush1.msra.mxu0 0.0
    %123 = vmatprep.subr.mxu0 0.0
    %124 = vmatpush1.msra.mxu0 0.0
    %125 = vmatprep.subr.mxu0 0.0
    %126 = vmatpush1.msra.mxu0 0.0
    %127 = vmatprep.subr.mxu0 0.0
    %128 = vmatpush1.msra.mxu0 0.0
    %129 = vmatprep.subr.mxu0 0.0
    %130 = vmatpush1.msra.mxu0 %v29
    %131 = vmatprep.subr.mxu0 0.0
    %132 = vmatpush1.msra.mxu0 %v28
    %133 = vmatprep.subr.mxu0 0.0
    %134 = vmatpush1.msra.mxu0 %v27
    %135 = vmatprep.subr.mxu0 0.0
    %136 = vmatpush1.msra.mxu0 %v26
    %137 = vmatprep.subr.mxu0 0.0
    %138 = vmatpush2.msra.mxu0 0.0
    %139 = vmatprep.subr.mxu0 0.0
    %140 = vmatpush2.msra.mxu0 0.0
    %141 = vmatprep.subr.mxu0 0.0
    %142 = vmatpush2.msra.mxu0 0.0
    %143 = vmatprep.subr.mxu0 0.0
    %144 = vmatpush2.msra.mxu0 0.0
    %145 = vmatprep.subr.mxu0 0.0
    %146 = vmatpush2.msra.mxu0 0.0
    %147 = vmatprep.subr.mxu0 0.0
    %148 = vmatpush2.msra.mxu0 0.0
    %149 = vmatprep.subr.mxu0 0.0
    %150 = vmatpush2.msra.mxu0 0.0
    %151 = vmatprep.subr.mxu0 0.0
    %152 = vmatpush2.msra.mxu0 0.0
    %153 = vmatprep.subr.mxu0 0.0
    %154 = vmatpush2.msra.mxu0 0.0
    %155 = vmatprep.subr.mxu0 0.0
    %156 = vmatpush2.msra.mxu0 0.0
    %157 = vmatprep.subr.mxu0 0.0
    %158 = vmatpush2.msra.mxu0 0.0
    %159 = vmatprep.subr.mxu0 0.0
    %160 = vmatpush2.msra.mxu0 0.0
    %161 = vmatprep.subr.mxu0 0.0
    %162 = vmatpush2.msra.mxu0 0.0
    %163 = vmatprep.subr.mxu0 0.0
    %164 = vmatpush2.msra.mxu0 0.0
    %165 = vmatprep.subr.mxu0 0.0
    %166 = vmatpush2.msra.mxu0 0.0
    %167 = vmatprep.subr.mxu0 0.0
    %168 = vmatpush2.msra.mxu0 0.0
    %169 = vmatprep.mubr.f32.mxu0 0.0
    %170 = vmatmul.mubr.f32.gmra.mxu0 %v103
    %v171 = vpop.f32.mrf.mxu0
    %v172 = vadd.f32 %v100, %v171
    %v173 = vpop.f32.mrf.mxu0
    %174 = vdwg.mxu0
    %v175 = vsel %vm35, %v172, -inf
    %176 = vmax.xlane.f32.xlu0 %v175
    %v177 = vpop.xlane.xlu0 %176
    %v178 = vsub.f32 %v172, %v177
    %v179 = vmul.f32 %v178, 1.442695
    %v180 = vpow.pop %v179
    %v181 = vsel %vm35, %v180, 0.0
    %182 = vadd.xlane.f32.xlu0 %v181
    %v183 = vpop.xlane.xlu0 %182
    %v184 = vlog2.pop %v183
    %v185 = vmul.f32 %v184, 0.6931472
    %v186 = vsub.f32 %v178, %v185
    %v187 = vsel %vm35, %v23, -inf
    %188 = vmax.xlane.f32.xlu0 %v187
    %v189 = vpop.xlane.xlu0 %188
    %v190 = vcvt.f32.s32.to.zero.pseudo %v189
    %vm191 = vcmp.eq.s32.totalorder %v32, %v190
    %v192 = vsel %vm191, 1, 0
    %v193 = vcvt.s32.f32 %v192
    %v194 = vmul.f32 %v193, %v186
    %v195 = vsel %vm35, %v194, 0.0
    %196 = vadd.xlane.f32.xlu0 %v195
    %v197 = vpop.xlane.xlu0 %196
    %v198 = vsub.f32 0.0, %v197
    %v199 = vsel %vm35, %v186, 0.0
    %200 = vadd.xlane.f32.xlu0 %v199
    %v201 = vpop.xlane.xlu0 %200
    %v202 = vsub.f32 0.0, %v201
    %v203 = vrcp.pop %v202
    %v204 = vmul.f32 %v198, %v203
    %vm205 = vcmask 7168
    %v206 = vsel %vm205, %v204, 0.0
    %207 = vadd.xlane.f32.xlu0 %v206
    %v208 = vpop.xlane.xlu0 %207
    %v209 = vrot.slane %v208, 4
    %v210 = vadd.f32 %v208, %v209
    %v211 = vrot.slane %v210, 2
    %v212 = vadd.f32 %v210, %v211
    %v213 = vrot.slane %v212, 1
    %v214 = vadd.f32 %v212, %v213
    %s215 = vtos %v214
    %v216 = vrcp.pop 8.0
    %s217 = vtos %v216
    %s218 = smul.f32 %s215, %s217
    %s219 = smul.f32 %s218, 0.1
    %s220 = sadd.f32 %s95, %s219
    %s221 = scalar_lea.smem [#allocation2], 0
    %222 = sst [smem:[%s221]] %s220
    // Predicated region
    $region22: #{tpu_custom_call.1} parent=1 // pred_check
      _
    $region23: #{tpu_custom_call.1} parent=1 // pred_check_branch
      %224 = sbr.rel (0) target = $region25
    $region24: #{tpu_custom_call.1} parent=1 // pred_region
      %s226 = ssub.s32 16, 16
      %227 = vsyncadd [#allocation3], %s226
      %230 = dma.smem_to_hbm [#allocation2], 16, %s5, [#allocation3]
    $region25: #{tpu_custom_call.1} parent=1 // pred_fallthru
      _
    // Predicated region
    $region26: #{tpu_custom_call.1} parent=1 // pred_check
      _
    $region27: #{tpu_custom_call.1} parent=1 // pred_check_branch
      %232 = sbr.rel (0) target = $region29
    $region28: #{tpu_custom_call.1} parent=1 // pred_region
      %233 = dma.done [#allocation3], 16
    $region29: #{tpu_custom_call.1} parent=1 // pred_fallthru
      _
    %234 = sfence
    %235 = vsyncpa [#allocation3], 1

</llo_original>
